<compile_context>
chip_gen: v5e
topology: v5e:2x2
jax: 0.10.0
libtpu: 0.0.40
codegen_flags: <defaults>
</compile_context>

<pallas_src>
import functools

import jax
import jax.numpy as jnp
from jax import lax
from jax.experimental import pallas as pl
from jax.experimental.pallas import tpu as pltpu


def _round_up(x, m):
    return (x + m - 1) // m * m


# ----------------------------------------------------------------------------
# Pallas kernel: l2norm -> fc -> l2norm -> (abs), one batch tile per grid step.
# ----------------------------------------------------------------------------
def _vsepp_head_kernel(x_ref, w_ref, b_ref, o_ref, *, no_imgnorm, use_abs, eps):
    # x_ref: [TM, D_in] f32  CNN-feature tile (batch-tiled, pipelined)
    # w_ref: [D_in, E]  bf16 fc weight (constant block index -> VMEM-resident)
    # b_ref: [1, E]     f32  fc bias
    # o_ref: [TM, E]    f32  output embedding tile
    x = x_ref[...]

    # l2norm over the feature dim: rsqrt (EUP) + multiply instead of
    # sqrt + vector divide (VALU).  eps avoids NaN on all-zero rows.
    inv = lax.rsqrt(jnp.sum(x * x, axis=1, keepdims=True) + eps)
    xn = (x * inv).astype(w_ref.dtype)  # bf16 operand for the MXU

    # fc projection on the MXU, f32 accumulation.
    f = jnp.dot(xn, w_ref[...], preferred_element_type=jnp.float32) + b_ref[...]

    if not no_imgnorm:
        inv2 = lax.rsqrt(jnp.sum(f * f, axis=1, keepdims=True) + eps)
        f = f * inv2

    if use_abs:
        f = jnp.abs(f)

    o_ref[...] = f.astype(o_ref.dtype)


def vsepp_head(
    features,
    fc_weight,
    fc_bias,
    *,
    no_imgnorm=False,
    use_abs=False,
    block_m=256,
    weight_dtype=jnp.bfloat16,
    eps=1e-12,
):
    """features: [B, D_in]; fc_weight: [D_in, E] (torch weight transposed); fc_bias: [E]."""
    B, D_in = features.shape
    E = fc_weight.shape[1]

    features = features.astype(jnp.float32)
    w = fc_weight.astype(weight_dtype)
    b = fc_bias.astype(jnp.float32).reshape(1, E)

    # Batch tile: multiple of 8 (sublane), ideally 128/256 for MXU alignment,
    # capped by block_m.  Pad B up so the last tile is full (padded rows are
    # zeros -> finite garbage that is sliced off below).
    tm = min(block_m, _round_up(B, 8))
    b_pad = _round_up(B, tm)
    if b_pad != B:
        features = jnp.pad(features, ((0, b_pad - B), (0, 0)))
    grid = (b_pad // tm,)

    # Explicit VMEM budget: (possibly double-buffered) resident weight +
    # double-buffered feature/output tiles + bias + headroom; capped at 64 MiB
    # so it fits v7x's per-core VMEM.
    w_itemsize = jnp.dtype(weight_dtype).itemsize
    vmem_bytes = (
        2 * D_in * E * w_itemsize      # weight (allow double-buffer allocation)
        + 2 * tm * D_in * 4            # double-buffered feature tiles
        + 2 * tm * E * 4               # double-buffered output tiles
        + E * 4                        # bias
        + (4 << 20)                    # scratch / vreg spill headroom
    )
    vmem_bytes = int(min(vmem_bytes, 64 * 1024 * 1024))

    kernel = functools.partial(
        _vsepp_head_kernel, no_imgnorm=no_imgnorm, use_abs=use_abs, eps=eps
    )

    out = pl.pallas_call(
        kernel,
        out_shape=jax.ShapeDtypeStruct((b_pad, E), jnp.float32),
        grid_spec=pltpu.PrefetchScalarGridSpec(
            num_scalar_prefetch=0,
            grid=grid,
            in_specs=[
                pl.BlockSpec((tm, D_in), lambda i: (i, 0)),  # features: batch-tiled
                pl.BlockSpec((D_in, E), lambda i: (0, 0)),   # weight: VMEM-resident
                pl.BlockSpec((1, E), lambda i: (0, 0)),      # bias:   VMEM-resident
            ],
            out_specs=pl.BlockSpec((tm, E), lambda i: (i, 0)),
        ),
        compiler_params=pltpu.CompilerParams(
            dimension_semantics=("parallel",),   # shard batch tiles across TCs (v7x)
            vmem_limit_bytes=vmem_bytes,
        ),
    )(features, w, b)

    return out[:B]


# ----------------------------------------------------------------------------
# Full forward: stand-in "cnn" backbone (glue) + Pallas head
# ----------------------------------------------------------------------------
def vsepp_image_encoder_forward(
    images, backbone_proj, fc_weight, fc_bias, *, no_imgnorm=False, use_abs=False
):
    # TODO(synk): pretrained torchvision resnet152/vgg19 backbone not
    # reproduced; stand-in extractor = global-avg-pool + linear + relu.
    pooled = jnp.mean(images, axis=(2, 3))        # [B, C]
    feats = jax.nn.relu(pooled @ backbone_proj)   # [B, D_in]
    return vsepp_head(
        feats, fc_weight, fc_bias, no_imgnorm=no_imgnorm, use_abs=use_abs
    )


# Pure-JAX reference of the VSE++ head (for correctness checking only).
def _vsepp_head_ref(features, fc_weight, fc_bias, *, no_imgnorm, use_abs, eps=1e-12):
    x = features / jnp.sqrt(jnp.sum(features * features, axis=1, keepdims=True) + eps)
    f = x @ fc_weight + fc_bias
    if not no_imgnorm:
        f = f / jnp.sqrt(jnp.sum(f * f, axis=1, keepdims=True) + eps)
    if use_abs:
        f = jnp.abs(f)
    return f


if __name__ == "__main__":
    # Small synthetic shapes consistent with the module's forward:
    #   images NCHW, cnn -> [B, D_in] features, fc -> [B, embed_size].
    # D_in / embed_size kept as multiples of 128 so the matmul / output stores
    # are lane-dense (real model: D_in=2048, embed_size=1024).
    B, C, H, W = 2, 4, 16, 16
    D_in = 128
    embed_size = 128
    use_abs = False
    no_imgnorm = False

    key = jax.random.PRNGKey(0)
    k_img, k_proj, k_fc = jax.random.split(key, 3)

    images = jax.random.normal(k_img, (B, C, H, W), dtype=jnp.float32)

    # Deterministic stand-in backbone projection.
    backbone_proj = jax.random.normal(k_proj, (C, D_in), dtype=jnp.float32) * 0.1

    # Xavier init for fc (matches _init_weights: uniform(-r, r), bias = 0).
    r = jnp.sqrt(6.0) / jnp.sqrt(float(D_in + embed_size))
    fc_weight = jax.random.uniform(
        k_fc, (D_in, embed_size), minval=-r, maxval=r, dtype=jnp.float32
    )
    fc_bias = jnp.zeros((embed_size,), dtype=jnp.float32)

    out = vsepp_image_encoder_forward(
        images, backbone_proj, fc_weight, fc_bias,
        no_imgnorm=no_imgnorm, use_abs=use_abs,
    )
    jax.block_until_ready(out)

    # Reference check (loose tolerance: kernel uses bf16 matmul operands).
    pooled = jnp.mean(images, axis=(2, 3))
    feats = jax.nn.relu(pooled @ backbone_proj)
    ref = _vsepp_head_ref(
        feats, fc_weight, fc_bias, no_imgnorm=no_imgnorm, use_abs=use_abs
    )

    assert out.shape == (B, embed_size)
    assert bool(jnp.all(jnp.isfinite(out)))
    assert bool(jnp.allclose(out, ref, atol=2e-2, rtol=2e-2))
    print("KERNEL_OK")
</pallas_src>

<mosaic_0001>
module attributes {stable_mosaic.version = 11 : i64} {
  func.func @_vsepp_head_kernel(%arg0: i32, %arg1: memref<8x128xf32, #tpu.memory_space<vmem>>, %arg2: memref<128x128xbf16, #tpu.memory_space<vmem>>, %arg3: memref<1x128xf32, #tpu.memory_space<vmem>>, %arg4: memref<8x128xf32, #tpu.memory_space<vmem>>) attributes {dimension_semantics = [#tpu.dimension_semantics<parallel>], iteration_bounds = array<i64: 1>, scalar_prefetch = 0 : i64, scratch_operands = 0 : i64, tpu.core_type = #tpu.core_type<tc>, window_params = [{transform_indices = @transform_0, window_bounds = array<i64: 8, 128>}, {pipeline_mode = #tpu.pipeline_mode<synchronous>, transform_indices = @transform_1, window_bounds = array<i64: 128, 128>}, {pipeline_mode = #tpu.pipeline_mode<synchronous>, transform_indices = @transform_2, window_bounds = array<i64: 1, 128>}, {transform_indices = @transform_3, window_bounds = array<i64: 8, 128>}]} {
    %c0 = arith.constant 0 : index
    %c0_0 = arith.constant 0 : index
    %0 = vector.load %arg1[%c0, %c0_0] : memref<8x128xf32, #tpu.memory_space<vmem>>, vector<8x128xf32>
    %1 = arith.mulf %0, %0 : vector<8x128xf32>
    %cst = arith.constant dense<0.000000e+00> : vector<8xf32>
    %2 = vector.multi_reduction <add>, %1, %cst [1] : vector<8x128xf32> to vector<8xf32>
    %3 = vector.shape_cast %2 : vector<8xf32> to vector<8x1xf32>
    %cst_1 = arith.constant 9.99999996E-13 : f32
    %4 = vector.broadcast %cst_1 : f32 to vector<8x1xf32>
    %5 = arith.addf %3, %4 : vector<8x1xf32>
    %6 = math.rsqrt %5 : vector<8x1xf32>
    %7 = vector.broadcast %6 : vector<8x1xf32> to vector<8x128xf32>
    %8 = arith.mulf %0, %7 : vector<8x128xf32>
    %9 = arith.truncf %8 : vector<8x128xf32> to vector<8x128xbf16>
    %c0_2 = arith.constant 0 : index
    %c0_3 = arith.constant 0 : index
    %10 = vector.load %arg2[%c0_2, %c0_3] : memref<128x128xbf16, #tpu.memory_space<vmem>>, vector<128x128xbf16>
    %cst_4 = arith.constant dense<0.000000e+00> : vector<8x128xf32>
    %11 = tpu.matmul %9, %10, %cst_4 {dimension_numbers = #tpu.dot_dimension_numbers<[1], [0], [0], [1], [0, 0, 1, 1], [], []>} : vector<8x128xbf16>, vector<128x128xbf16>, vector<8x128xf32> -> vector<8x128xf32>
    %c0_5 = arith.constant 0 : index
    %c0_6 = arith.constant 0 : index
    %12 = vector.load %arg3[%c0_5, %c0_6] : memref<1x128xf32, #tpu.memory_space<vmem>>, vector<1x128xf32>
    %13 = vector.broadcast %12 : vector<1x128xf32> to vector<8x128xf32>
    %14 = arith.addf %11, %13 : vector<8x128xf32>
    %15 = arith.mulf %14, %14 : vector<8x128xf32>
    %cst_7 = arith.constant dense<0.000000e+00> : vector<8xf32>
    %16 = vector.multi_reduction <add>, %15, %cst_7 [1] : vector<8x128xf32> to vector<8xf32>
    %17 = vector.shape_cast %16 : vector<8xf32> to vector<8x1xf32>
    %cst_8 = arith.constant 9.99999996E-13 : f32
    %18 = vector.broadcast %cst_8 : f32 to vector<8x1xf32>
    %19 = arith.addf %17, %18 : vector<8x1xf32>
    %20 = math.rsqrt %19 : vector<8x1xf32>
    %21 = vector.broadcast %20 : vector<8x1xf32> to vector<8x128xf32>
    %22 = arith.mulf %14, %21 : vector<8x128xf32>
    %c0_9 = arith.constant 0 : index
    %c0_10 = arith.constant 0 : index
    %23 = vector.load %arg4[%c0_9, %c0_10] : memref<8x128xf32, #tpu.memory_space<vmem>>, vector<8x128xf32>
    tpu.vector_store %arg4[%c0_9, %c0_10], %22 {strides = array<i32>} : memref<8x128xf32, #tpu.memory_space<vmem>>, vector<8x128xf32>,
    return
  }
  func.func @transform_0(%arg0: i32) -> (i32, i32) {
    %c0_i32 = arith.constant 0 : i32
    %c0_i32_0 = arith.constant 0 : i32
    return %arg0, %c0_i32 : i32, i32
  }
  func.func @transform_1(%arg0: i32) -> (i32, i32) {
    %c0_i32 = arith.constant 0 : i32
    %c0_i32_0 = arith.constant 0 : i32
    %c0_i32_1 = arith.constant 0 : i32
    return %c0_i32, %c0_i32_0 : i32, i32
  }
  func.func @transform_2(%arg0: i32) -> (i32, i32) {
    %c0_i32 = arith.constant 0 : i32
    %c0_i32_0 = arith.constant 0 : i32
    %c0_i32_1 = arith.constant 0 : i32
    return %c0_i32, %c0_i32_0 : i32, i32
  }
  func.func @transform_3(%arg0: i32) -> (i32, i32) {
    %c0_i32 = arith.constant 0 : i32
    %c0_i32_0 = arith.constant 0 : i32
    return %arg0, %c0_i32 : i32, i32
  }
}

</mosaic_0001>

<llo_original>
// kernel: tpu_custom_call.1
$region0: #{tpu_custom_call.1}
  #allocation0 [shape = 'u32[]', space=smem, size = 0x4, offset = 0x4, fixed_abs, tag = 'smem constant byte address 0x4 - core index']
  #allocation1 [shape = 'u32[72,128]{1,0:T(1,128)}', space=vmem, size = 0x9000, scoped, tag = 'internal scratch']
  %s0 = inlined_call_operand.hbm [shape: f32[8,128], index: 0, kind: input, shape index: {}]
  %s1 = inlined_call_operand.hbm [shape: bf16[128,128], index: 1, kind: input, shape index: {}]
  %s2 = inlined_call_operand.vmem [shape: f32[1,128], index: 2, kind: input, shape index: {}]
  %s3 = inlined_call_operand.hbm [shape: f32[8,128], index: 3, kind: output, shape index: {}]
  %s4 = sld [smem:[#allocation0]]
  $region30: #{tpu_custom_call.1} parent=0
    _
  %s6 = ssub.s32 1, %s4
  %s7 = scalar_select 0, %s6, %s4
  $region1: #{tpu_custom_call.1} parent=0
    #allocation2 [shape = 'u8[4096]{0}', space=vmem, size = 0x1000, scoped, tag = 'input window, operand 0, single buffered']
    #allocation3 [shape = 's32[1]{0}', space=sflag, size = 0x4, scoped, tag = 'scoped memory for tpu_custom_call.1']
    #allocation4 [shape = 's32[1]{0}', space=sflag, size = 0x4, scoped, tag = 'scoped memory for tpu_custom_call.1']
    #allocation5 [shape = 'u8[32768]{0}', space=vmem, size = 0x8000, scoped, tag = 'input window, operand 1, single buffered']
    #allocation6 [shape = 's32[1]{0}', space=sflag, size = 0x4, scoped, tag = 'scoped memory for tpu_custom_call.1']
    #allocation7 [shape = 'u8[4096]{0}', space=vmem, size = 0x1000, scoped, tag = 'output window, operand 0, single buffered']
    %8 = vsyncpa [#allocation3], 0
    %9 = vsyncpa [#allocation6], 0
    %10 = vsyncpa [#allocation4], 0
    // Predicated region
    $region2: #{tpu_custom_call.1} parent=1 // pred_check
      _
    $region3: #{tpu_custom_call.1} parent=1 // pred_check_branch
      %12 = sbr.rel (0) target = $region5
    $region4: #{tpu_custom_call.1} parent=1 // pred_region
      %14 = vsyncadd [#allocation3], 0
      %s16 = sshll.u32 %s0, 4
      %s17 = int_to_ptr.hbm [resolvable:$true] %s16
      %s18 = sshll.u32 [#allocation2], 4
      %s19 = int_to_ptr.vmem [resolvable:$true] %s18
      %21 = dma.hbm_to_vmem [thread:$0]  %s17, 128, %s19, [#allocation3]
    $region5: #{tpu_custom_call.1} parent=1 // pred_fallthru
      _
    // Predicated region
    $region6: #{tpu_custom_call.1} parent=1 // pred_check
      _
    $region7: #{tpu_custom_call.1} parent=1 // pred_check_branch
      %23 = sbr.rel (0) target = $region9
    $region8: #{tpu_custom_call.1} parent=1 // pred_region
      %25 = vsyncadd [#allocation6], 0
      %s26 = sshll.u32 %s1, 4
      %s27 = int_to_ptr.hbm [resolvable:$true] %s26
      %s28 = sshll.u32 [#allocation5], 4
      %s29 = int_to_ptr.vmem [resolvable:$true] %s28
      %34 = dma.hbm_to_vmem [thread:$0]  %s27, 1024, %s29, [#allocation6], 64, 64, 4
    $region9: #{tpu_custom_call.1} parent=1 // pred_fallthru
      _
    // Predicated region
    $region10: #{tpu_custom_call.1} parent=1 // pred_check
      _
    $region11: #{tpu_custom_call.1} parent=1 // pred_check_branch
      %36 = sbr.rel (0) target = $region13
    $region12: #{tpu_custom_call.1} parent=1 // pred_region
      _
    $region13: #{tpu_custom_call.1} parent=1 // pred_fallthru
      _
    // Predicated region
    $region14: #{tpu_custom_call.1} parent=1 // pred_check
      _
    $region15: #{tpu_custom_call.1} parent=1 // pred_check_branch
      %38 = sbr.rel (0) target = $region17
    $region16: #{tpu_custom_call.1} parent=1 // pred_region
      %40 = dma.done [#allocation3], 128
    $region17: #{tpu_custom_call.1} parent=1 // pred_fallthru
      _
    // Predicated region
    $region18: #{tpu_custom_call.1} parent=1 // pred_check
      _
    $region19: #{tpu_custom_call.1} parent=1 // pred_check_branch
      %42 = sbr.rel (0) target = $region21
    $region20: #{tpu_custom_call.1} parent=1 // pred_region
      %44 = dma.done [#allocation6], 1024
    $region21: #{tpu_custom_call.1} parent=1 // pred_fallthru
      _
    %v45 = vld [vmem:[#allocation2] sm:$0xff]
    %v46 = vmul.f32 %v45, %v45
    %47 = vadd.xlane.f32.xlu0 %v46
    %v48 = vpop.xlane.xlu0 %47
    %v49 = vadd.f32 %v48, 1e-12
    %v50 = vrsqrt.pop %v49
    %v51 = vmul.f32 %v50, %v49
    %v52 = vmul.f32 %v51, %v50
    %v53 = vmul.f32 0.5, %v52
    %v54 = vsub.f32 1.5, %v53
    %v55 = vmul.f32 %v50, %v54
    %vm56 = vweird.f32 %v49
    %vm57 = vweird.f32 %v50
    %vm58 = vmor %vm56, %vm57
    %v59 = vsel %vm58, %v50, %v55
    %v60 = vmul.f32 %v45, %v59
    %v61 = vpack.c.bf16 %v60, %v60
    %v62 = vld [vmem:[#allocation5] sm:$0xf]
    %v63 = vld [vmem:[#allocation5 + $0x4] sm:$0xf]
    %v64 = vld [vmem:[#allocation5 + $0x8] sm:$0xf]
    %v65 = vld [vmem:[#allocation5 + $0xc] sm:$0xf]
    %v66 = vld [vmem:[#allocation5 + $0x10] sm:$0xf]
    %v67 = vld [vmem:[#allocation5 + $0x14] sm:$0xf]
    %v68 = vld [vmem:[#allocation5 + $0x18] sm:$0xf]
    %v69 = vld [vmem:[#allocation5 + $0x1c] sm:$0xf]
    %v70 = vld [vmem:[#allocation5 + $0x20] sm:$0xf]
    %v71 = vld [vmem:[#allocation5 + $0x24] sm:$0xf]
    %v72 = vld [vmem:[#allocation5 + $0x28] sm:$0xf]
    %v73 = vld [vmem:[#allocation5 + $0x2c] sm:$0xf]
    %v74 = vld [vmem:[#allocation5 + $0x30] sm:$0xf]
    %v75 = vld [vmem:[#allocation5 + $0x34] sm:$0xf]
    %v76 = vld [vmem:[#allocation5 + $0x38] sm:$0xf]
    %v77 = vld [vmem:[#allocation5 + $0x3c] sm:$0xf]
    %v78 = vld [vmem:[%s2] sm:$0x1]
    %v80 = vperm.slane %v78, 0
    %v98 = vunpack.c.l.b16 %v62
    %v99 = vunpack.c.l.b16 %v63
    %v100 = vunpack.c.l.b16 %v64
    %v101 = vunpack.c.l.b16 %v65
    %v102 = vunpack.c.l.b16 %v66
    %v103 = vunpack.c.l.b16 %v67
    %v104 = vunpack.c.l.b16 %v68
    %v105 = vunpack.c.l.b16 %v69
    %v106 = vunpack.c.l.b16 %v70
    %v107 = vunpack.c.l.b16 %v71
    %v108 = vunpack.c.l.b16 %v72
    %v109 = vunpack.c.l.b16 %v73
    %v110 = vunpack.c.l.b16 %v74
    %v111 = vunpack.c.l.b16 %v75
    %v112 = vunpack.c.l.b16 %v76
    %v113 = vunpack.c.l.b16 %v77
    %v114 = vpack.c.b16 %v99, %v98
    %v115 = vpack.c.b16 %v101, %v100
    %v116 = vpack.c.b16 %v103, %v102
    %v117 = vpack.c.b16 %v105, %v104
    %v118 = vpack.c.b16 %v107, %v106
    %v119 = vpack.c.b16 %v109, %v108
    %v120 = vpack.c.b16 %v111, %v110
    %v121 = vpack.c.b16 %v113, %v112
    %130 = vmatpush.bf16.msra.mxu0 %v121
    %131 = vmatpush.bf16.msra.mxu0 %v120
    %132 = vmatpush.bf16.msra.mxu0 %v119
    %133 = vmatpush.bf16.msra.mxu0 %v118
    %134 = vmatpush.bf16.msra.mxu0 %v117
    %135 = vmatpush.bf16.msra.mxu0 %v116
    %136 = vmatpush.bf16.msra.mxu0 %v115
    %137 = vmatpush.bf16.msra.mxu0 %v114
    %138 = vmatmul.bf16.gmra.mxu0 %v61
    %v139 = vpop.f32.mrf.mxu0
    %v140 = vadd.f32 %v80, %v139
    %v141 = vpop.f32.mrf.mxu0
    %142 = vdwg.mxu0
    %v143 = vmul.f32 %v140, %v140
    %144 = vadd.xlane.f32.xlu0 %v143
    %v145 = vpop.xlane.xlu0 %144
    %v146 = vadd.f32 %v145, 1e-12
    %v147 = vrsqrt.pop %v146
    %v148 = vmul.f32 %v147, %v146
    %v149 = vmul.f32 %v148, %v147
    %v150 = vmul.f32 0.5, %v149
    %v151 = vsub.f32 1.5, %v150
    %v152 = vmul.f32 %v147, %v151
    %vm153 = vweird.f32 %v146
    %vm154 = vweird.f32 %v147
    %vm155 = vmor %vm153, %vm154
    %v156 = vsel %vm155, %v147, %v152
    %v157 = vmul.f32 %v140, %v156
    %158 = vst [vmem:[#allocation7] sm:$0xff] %v157
    // Predicated region
    $region22: #{tpu_custom_call.1} parent=1 // pred_check
      _
    $region23: #{tpu_custom_call.1} parent=1 // pred_check_branch
      %160 = sbr.rel (0) target = $region25
    $region24: #{tpu_custom_call.1} parent=1 // pred_region
      %162 = vsyncadd [#allocation4], 0
      %s164 = sshll.u32 [#allocation7], 4
      %s165 = int_to_ptr.vmem [resolvable:$true] %s164
      %s166 = sshll.u32 %s3, 4
      %s167 = int_to_ptr.hbm [resolvable:$true] %s166
      %169 = dma.vmem_to_hbm [thread:$0]  %s165, 128, %s167, [#allocation4]
    $region25: #{tpu_custom_call.1} parent=1 // pred_fallthru
      _
    // Predicated region
    $region26: #{tpu_custom_call.1} parent=1 // pred_check
      _
    $region27: #{tpu_custom_call.1} parent=1 // pred_check_branch
      %171 = sbr.rel (0) target = $region29
    $region28: #{tpu_custom_call.1} parent=1 // pred_region
      %173 = dma.done [#allocation4], 128
    $region29: #{tpu_custom_call.1} parent=1 // pred_fallthru
      _
    %174 = vsyncpa [#allocation3], 1
    %175 = vsyncpa [#allocation6], 1
    %176 = vsyncpa [#allocation4], 1

</llo_original>
